<compile_context>
chip_gen: v7x
topology: tpu7x:2x2x1
jax: 0.10.0
libtpu: 0.0.40
codegen_flags: <defaults>
</compile_context>

<pallas_src>
import jax
import jax.numpy as jnp
from jax import lax
from jax.experimental import pallas as pl
from jax.experimental.pallas import tpu as pltpu

_LANES = 128
_ACC_SUB = 8                       # sublane height of the f32 partial accumulators
_MAX_TILE_C = 2048                 # max feature chunks (of 128 lanes) per grid step
_VMEM_BUDGET = 24 * 1024 * 1024    # budget for pipeline buffers + f32 temps
_VMEM_LIMIT = 32 * 1024 * 1024     # scoped VMEM limit (safe on v5e/v6e/v7x)


def _make_recall_kernel(n_inner, tile_c, c_total, acc_sub, needs_mask):
    """Per grid step: fold the (N, tile_c, 128) TP/FN masks down to small
    (N, acc_sub, 128) f32 partials and accumulate into the output refs."""

    def kernel(logits_ref, labels_ref, tp_ref, fn_ref):
        k = pl.program_id(1)

        @pl.when(k == 0)
        def _init():
            tp_ref[...] = jnp.zeros_like(tp_ref)
            fn_ref[...] = jnp.zeros_like(fn_ref)

        x = logits_ref[...]                 # (N, tile_c, 128), native dtype
        y = labels_ref[...]

        # sigmoid(x) > 0.5  <=>  x > 0  (sigmoid(0) == 0.5 exactly) -> no EUP work.
        pred_pos = x > 0
        tp_m = pred_pos & (y == 1)
        fn_m = pred_pos & (y == 0)

        if needs_mask:
            # Ragged / phantom last block: zero feature chunks that lie beyond
            # the real array (their VMEM contents are unspecified).
            start = (pl.program_id(0) * n_inner + k) * tile_c
            c_idx = lax.broadcasted_iota(jnp.int32, tp_m.shape, 1)
            valid = (start + c_idx) < c_total
            tp_m = tp_m & valid
            fn_m = fn_m & valid

        n = tp_m.shape[0]
        tp_f = tp_m.astype(jnp.float32)
        fn_f = fn_m.astype(jnp.float32)

        if acc_sub == 1:
            # Tiny single-block case (tile_c == c_total not a multiple of 8).
            tp_ref[...] += jnp.sum(tp_f, axis=1, keepdims=True)
            fn_ref[...] += jnp.sum(fn_f, axis=1, keepdims=True)
        else:
            g = tile_c // acc_sub
            if g == 1:
                tp_ref[...] += tp_f
                fn_ref[...] += fn_f
            else:
                # Fold groups of 8 sublane-chunks with whole-vreg VALU adds;
                # the single cross-lane reduce happens in the JAX wrapper.
                tp_ref[...] += jnp.sum(tp_f.reshape(n, g, acc_sub, _LANES), axis=1)
                fn_ref[...] += jnp.sum(fn_f.reshape(n, g, acc_sub, _LANES), axis=1)

    return kernel


def recall_pallas(logits, labels, *, max_tile_c=None):
    """Pallas implementation of Recall.forward(logits, labels)."""
    N = logits.shape[0]
    lg = logits.reshape(N, -1)
    lb = labels.reshape(N, -1)
    F = lg.shape[1]

    # Pad only to the next multiple of 128 lanes (zero logits contribute to
    # neither TP nor FN). Ragged blocks beyond this are masked in-kernel.
    f_pad = ((F + _LANES - 1) // _LANES) * _LANES
    if f_pad != F:
        lg = jnp.pad(lg, ((0, 0), (0, f_pad - F)))
        lb = jnp.pad(lb, ((0, 0), (0, f_pad - F)))
    c_total = f_pad // _LANES

    lg3 = lg.reshape(N, c_total, _LANES)
    lb3 = lb.reshape(N, c_total, _LANES)

    is_lg = jnp.dtype(lg.dtype).itemsize
    is_lb = jnp.dtype(lb.dtype).itemsize
    # Dtype-native sublane multiple: 8 for f32, 16 for bf16, 32 for int8/fp8.
    sub = max(8, 32 // min(is_lg, is_lb))

    # VMEM budget per chunk column: 2 inputs x 2 pipeline buffers in native
    # dtype + headroom for f32 elementwise temps (the accumulators are tiny).
    per_chunk = N * _LANES * (2 * (is_lg + is_lb) + 8)
    cap_c = _VMEM_BUDGET // per_chunk
    cap_c = (cap_c // sub) * sub
    cap_c = max(sub, min(_MAX_TILE_C, cap_c))
    if max_tile_c is not None:                      # test-only override
        cap_c = max(sub, min(cap_c, (max_tile_c // sub) * sub))

    if c_total <= cap_c:
        tile_c = c_total                            # single feature block
        total_blocks = 1
    else:
        tile_c = cap_c                              # multiple of sub (>= 8)
        total_blocks = pl.cdiv(c_total, tile_c)

    # Leading "parallel" axis over feature mega-chunks (v7x megacore; no-op on
    # single-TC chips). Inner reduction axis is "arbitrary".
    n_par = 2 if total_blocks >= 2 else 1
    n_inner = pl.cdiv(total_blocks, n_par)
    grid_blocks = n_par * n_inner

    needs_mask = grid_blocks * tile_c != c_total
    needs_clamp = grid_blocks > total_blocks
    acc_sub = _ACC_SUB if tile_c % _ACC_SUB == 0 else 1

    last_block = total_blocks - 1
    if needs_clamp:
        # Phantom blocks re-read the last real block; the in-kernel mask zeroes
        # their contribution (start >= c_total).
        def in_map(p, k):
            return (0, jnp.minimum(p * n_inner + k, last_block), 0)
    else:
        def in_map(p, k):
            return (0, p * n_inner + k, 0)

    kernel = _make_recall_kernel(n_inner, tile_c, c_total, acc_sub, needs_mask)

    tp_part, fn_part = pl.pallas_call(
        kernel,
        out_shape=(
            jax.ShapeDtypeStruct((n_par, N, acc_sub, _LANES), jnp.float32),
            jax.ShapeDtypeStruct((n_par, N, acc_sub, _LANES), jnp.float32),
        ),
        grid=(n_par, n_inner),
        in_specs=[
            pl.BlockSpec((N, tile_c, _LANES), in_map),
            pl.BlockSpec((N, tile_c, _LANES), in_map),
        ],
        out_specs=(
            pl.BlockSpec((None, N, acc_sub, _LANES), lambda p, k: (p, 0, 0, 0)),
            pl.BlockSpec((None, N, acc_sub, _LANES), lambda p, k: (p, 0, 0, 0)),
        ),
        compiler_params=pltpu.CompilerParams(
            dimension_semantics=("parallel", "arbitrary"),
            vmem_limit_bytes=_VMEM_LIMIT,
        ),
    )(lg3, lb3)

    # Tiny finalize in JAX: reduce the lane-dense partials, divide, mean.
    tp = jnp.sum(tp_part, axis=(0, 2, 3))           # (N,)
    fn = jnp.sum(fn_part, axis=(0, 2, 3))           # (N,)
    recall = tp / (tp + fn + 1e-12)
    return jnp.sum(recall) / N


def recall_reference(logits, labels):
    """Pure-JAX reference matching the PyTorch module."""
    N = logits.shape[0]
    lg = logits.reshape(N, -1).astype(jnp.float32)
    lb = labels.reshape(N, -1).astype(jnp.float32)
    probs = (jax.nn.sigmoid(lg) > 0.5).astype(jnp.float32)
    tp = jnp.sum(((probs == 1.0) & (lb == 1.0)).astype(jnp.float32), axis=1)
    fn = jnp.sum(((probs == 1.0) & (lb == 0.0)).astype(jnp.float32), axis=1)
    recall = tp / (tp + fn + 1e-12)
    return jnp.sum(recall) / N


def _run_case(name, logits, labels, **kw):
    out = jax.block_until_ready(recall_pallas(logits, labels, **kw))
    ref = recall_reference(logits, labels)
    assert jnp.allclose(out, ref, atol=1e-6, rtol=1e-6), (name, out, ref)


if __name__ == "__main__":
    key = jax.random.PRNGKey(0)
    k1, k2, k3, k4 = jax.random.split(key, 4)

    # Primary case: NCHW logits/labels (N=2, C=4, H=16, W=16) -> F = 1024.
    logits = jax.random.normal(k1, (2, 4, 16, 16), dtype=jnp.float32)
    labels = (jax.random.uniform(k2, (2, 4, 16, 16)) > 0.5).astype(jnp.float32)
    _run_case("base", logits, labels)

    # Multi-block + parallel axis + ragged last block (in-kernel iota mask).
    lg2 = jax.random.normal(k3, (2, 200 * 128), dtype=jnp.float32)
    lb2 = (jax.random.uniform(k4, (2, 200 * 128)) > 0.5).astype(jnp.float32)
    _run_case("ragged", lg2, lb2, max_tile_c=64)

    # Odd block count -> phantom block handled by clamped index_map + mask.
    _run_case("phantom", lg2[:, : 144 * 128], lb2[:, : 144 * 128], max_tile_c=48)

    # Feature dim not a multiple of 128 (lane pad) and fewer than 8 chunks.
    lg3 = jax.random.normal(k3, (2, 4, 10, 10), dtype=jnp.float32)
    lb3 = (jax.random.uniform(k4, (2, 4, 10, 10)) > 0.5).astype(jnp.float32)
    _run_case("lane_pad", lg3, lb3)

    print("KERNEL_OK")
</pallas_src>

<mosaic_0001>
module attributes {stable_mosaic.version = 11 : i64} {
  func.func @kernel(%arg0: i32, %arg1: i32, %arg2: memref<2x8x128xf32, #tpu.memory_space<vmem>>, %arg3: memref<2x8x128xf32, #tpu.memory_space<vmem>>, %arg4: memref<1x2x8x128xf32, #tpu.memory_space<vmem>>, %arg5: memref<1x2x8x128xf32, #tpu.memory_space<vmem>>) attributes {dimension_semantics = [#tpu.dimension_semantics<parallel>, #tpu.dimension_semantics<arbitrary>], iteration_bounds = array<i64: 1, 1>, scalar_prefetch = 0 : i64, scratch_operands = 0 : i64, tpu.core_type = #tpu.core_type<tc>, window_params = [{transform_indices = @transform_0, window_bounds = array<i64: 2, 8, 128>}, {transform_indices = @transform_1, window_bounds = array<i64: 2, 8, 128>}, {transform_indices = @transform_2, window_bounds = array<i64: 1, 2, 8, 128>}, {transform_indices = @transform_3, window_bounds = array<i64: 1, 2, 8, 128>}]} {
    %c0_i32 = arith.constant 0 : i32
    %0 = arith.cmpi eq, %arg1, %c0_i32 : i32
    %1 = arith.extui %0 : i1 to i32
    %c0_i32_0 = arith.constant 0 : i32
    %2 = arith.cmpi ne, %1, %c0_i32_0 : i32
    scf.if %2 {
      %cst_24 = arith.constant 0.000000e+00 : f32
      %29 = vector.broadcast %cst_24 : f32 to vector<2x8x128xf32>
      %c0_25 = arith.constant 0 : index
      %c0_26 = arith.constant 0 : index
      %c0_27 = arith.constant 0 : index
      %c0_28 = arith.constant 0 : index
      %30 = vector.load %arg4[%c0_25, %c0_26, %c0_27, %c0_28] : memref<1x2x8x128xf32, #tpu.memory_space<vmem>>, vector<1x2x8x128xf32>
      %31 = vector.shape_cast %30 : vector<1x2x8x128xf32> to vector<2x8x128xf32>
      %32 = vector.shape_cast %29 : vector<2x8x128xf32> to vector<1x2x8x128xf32>
      tpu.vector_store %arg4[%c0_25, %c0_26, %c0_27, %c0_28], %32 {strides = array<i32>} : memref<1x2x8x128xf32, #tpu.memory_space<vmem>>, vector<1x2x8x128xf32>,
      %cst_29 = arith.constant 0.000000e+00 : f32
      %33 = vector.broadcast %cst_29 : f32 to vector<2x8x128xf32>
      %c0_30 = arith.constant 0 : index
      %c0_31 = arith.constant 0 : index
      %c0_32 = arith.constant 0 : index
      %c0_33 = arith.constant 0 : index
      %34 = vector.load %arg5[%c0_30, %c0_31, %c0_32, %c0_33] : memref<1x2x8x128xf32, #tpu.memory_space<vmem>>, vector<1x2x8x128xf32>
      %35 = vector.shape_cast %34 : vector<1x2x8x128xf32> to vector<2x8x128xf32>
      %36 = vector.shape_cast %33 : vector<2x8x128xf32> to vector<1x2x8x128xf32>
      tpu.vector_store %arg5[%c0_30, %c0_31, %c0_32, %c0_33], %36 {strides = array<i32>} : memref<1x2x8x128xf32, #tpu.memory_space<vmem>>, vector<1x2x8x128xf32>,
    } else {
    }
    %c0 = arith.constant 0 : index
    %c0_1 = arith.constant 0 : index
    %c0_2 = arith.constant 0 : index
    %3 = vector.load %arg2[%c0, %c0_1, %c0_2] : memref<2x8x128xf32, #tpu.memory_space<vmem>>, vector<2x8x128xf32>
    %c0_3 = arith.constant 0 : index
    %c0_4 = arith.constant 0 : index
    %c0_5 = arith.constant 0 : index
    %4 = vector.load %arg3[%c0_3, %c0_4, %c0_5] : memref<2x8x128xf32, #tpu.memory_space<vmem>>, vector<2x8x128xf32>
    %cst = arith.constant 0.000000e+00 : f32
    %5 = vector.broadcast %cst : f32 to vector<2x8x128xf32>
    %6 = arith.cmpf ogt, %3, %5 : vector<2x8x128xf32>
    %cst_6 = arith.constant 1.000000e+00 : f32
    %7 = vector.broadcast %cst_6 : f32 to vector<2x8x128xf32>
    %8 = arith.cmpf oeq, %4, %7 : vector<2x8x128xf32>
    %9 = arith.andi %6, %8 : vector<2x8x128xi1>
    %cst_7 = arith.constant 0.000000e+00 : f32
    %10 = vector.broadcast %cst_7 : f32 to vector<2x8x128xf32>
    %11 = arith.cmpf oeq, %4, %10 : vector<2x8x128xf32>
    %12 = arith.andi %6, %11 : vector<2x8x128xi1>
    %13 = arith.extui %9 : vector<2x8x128xi1> to vector<2x8x128xi32>
    %14 = arith.sitofp %13 : vector<2x8x128xi32> to vector<2x8x128xf32>
    %15 = arith.extui %12 : vector<2x8x128xi1> to vector<2x8x128xi32>
    %16 = arith.sitofp %15 : vector<2x8x128xi32> to vector<2x8x128xf32>
    %c0_8 = arith.constant 0 : index
    %c0_9 = arith.constant 0 : index
    %c0_10 = arith.constant 0 : index
    %c0_11 = arith.constant 0 : index
    %17 = vector.load %arg4[%c0_8, %c0_9, %c0_10, %c0_11] : memref<1x2x8x128xf32, #tpu.memory_space<vmem>>, vector<1x2x8x128xf32>
    %18 = vector.shape_cast %17 : vector<1x2x8x128xf32> to vector<2x8x128xf32>
    %19 = arith.addf %18, %14 : vector<2x8x128xf32>
    %c0_12 = arith.constant 0 : index
    %c0_13 = arith.constant 0 : index
    %c0_14 = arith.constant 0 : index
    %c0_15 = arith.constant 0 : index
    %20 = vector.load %arg4[%c0_12, %c0_13, %c0_14, %c0_15] : memref<1x2x8x128xf32, #tpu.memory_space<vmem>>, vector<1x2x8x128xf32>
    %21 = vector.shape_cast %20 : vector<1x2x8x128xf32> to vector<2x8x128xf32>
    %22 = vector.shape_cast %19 : vector<2x8x128xf32> to vector<1x2x8x128xf32>
    tpu.vector_store %arg4[%c0_12, %c0_13, %c0_14, %c0_15], %22 {strides = array<i32>} : memref<1x2x8x128xf32, #tpu.memory_space<vmem>>, vector<1x2x8x128xf32>,
    %c0_16 = arith.constant 0 : index
    %c0_17 = arith.constant 0 : index
    %c0_18 = arith.constant 0 : index
    %c0_19 = arith.constant 0 : index
    %23 = vector.load %arg5[%c0_16, %c0_17, %c0_18, %c0_19] : memref<1x2x8x128xf32, #tpu.memory_space<vmem>>, vector<1x2x8x128xf32>
    %24 = vector.shape_cast %23 : vector<1x2x8x128xf32> to vector<2x8x128xf32>
    %25 = arith.addf %24, %16 : vector<2x8x128xf32>
    %c0_20 = arith.constant 0 : index
    %c0_21 = arith.constant 0 : index
    %c0_22 = arith.constant 0 : index
    %c0_23 = arith.constant 0 : index
    %26 = vector.load %arg5[%c0_20, %c0_21, %c0_22, %c0_23] : memref<1x2x8x128xf32, #tpu.memory_space<vmem>>, vector<1x2x8x128xf32>
    %27 = vector.shape_cast %26 : vector<1x2x8x128xf32> to vector<2x8x128xf32>
    %28 = vector.shape_cast %25 : vector<2x8x128xf32> to vector<1x2x8x128xf32>
    tpu.vector_store %arg5[%c0_20, %c0_21, %c0_22, %c0_23], %28 {strides = array<i32>} : memref<1x2x8x128xf32, #tpu.memory_space<vmem>>, vector<1x2x8x128xf32>,
    return
  }
  func.func @transform_0(%arg0: i32, %arg1: i32) -> (i32, i32, i32) {
    %c1_i32 = arith.constant 1 : i32
    %0 = arith.muli %arg0, %c1_i32 : i32
    %1 = arith.addi %0, %arg1 : i32
    %c0_i32 = arith.constant 0 : i32
    %c0_i32_0 = arith.constant 0 : i32
    %c0_i32_1 = arith.constant 0 : i32
    return %c0_i32, %1, %c0_i32_0 : i32, i32, i32
  }
  func.func @transform_1(%arg0: i32, %arg1: i32) -> (i32, i32, i32) {
    %c1_i32 = arith.constant 1 : i32
    %0 = arith.muli %arg0, %c1_i32 : i32
    %1 = arith.addi %0, %arg1 : i32
    %c0_i32 = arith.constant 0 : i32
    %c0_i32_0 = arith.constant 0 : i32
    %c0_i32_1 = arith.constant 0 : i32
    return %c0_i32, %1, %c0_i32_0 : i32, i32, i32
  }
  func.func @transform_2(%arg0: i32, %arg1: i32) -> (i32, i32, i32, i32) {
    %c0_i32 = arith.constant 0 : i32
    %c0_i32_0 = arith.constant 0 : i32
    %c0_i32_1 = arith.constant 0 : i32
    %c0_i32_2 = arith.constant 0 : i32
    return %arg0, %c0_i32, %c0_i32_0, %c0_i32_1 : i32, i32, i32, i32
  }
  func.func @transform_3(%arg0: i32, %arg1: i32) -> (i32, i32, i32, i32) {
    %c0_i32 = arith.constant 0 : i32
    %c0_i32_0 = arith.constant 0 : i32
    %c0_i32_1 = arith.constant 0 : i32
    %c0_i32_2 = arith.constant 0 : i32
    return %arg0, %c0_i32, %c0_i32_0, %c0_i32_1 : i32, i32, i32, i32
  }
}

</mosaic_0001>

<llo_original>
// kernel: tpu_custom_call.1
$region0: #{tpu_custom_call.1}
  #allocation0 [shape = 'u32[]', space=smem, size = 0x4, offset = 0x4, fixed_abs, tag = 'smem constant byte address 0x4 - core index']
  #allocation1 [shape = 'u32[144,128]{1,0:T(1,128)}', space=vmem, size = 0x12000, scoped, tag = 'internal scratch']
  %s0 = inlined_call_operand.hbm [shape: f32[2,8,128], index: 0, kind: input, shape index: {}]
  %s1 = inlined_call_operand.hbm [shape: f32[2,8,128], index: 1, kind: input, shape index: {}]
  %s2 = inlined_call_operand.hbm [shape: f32[1,2,8,128], index: 2, kind: output, shape index: {0}]
  %s3 = inlined_call_operand.hbm [shape: f32[1,2,8,128], index: 3, kind: output, shape index: {1}]
  %4 = xla_tuple %s2, %s3
  %s5 = sld [smem:[#allocation0]]
  $region38: #{tpu_custom_call.1} parent=0
    _
  %s7 = ssub.s32 1, %s5
  %s8 = scalar_select 0, %s7, %s5
  $region1: #{tpu_custom_call.1} parent=0
    #allocation2 [shape = 'u8[8192]{0}', space=vmem, size = 0x2000, scoped, tag = 'input window, operand 0, single buffered']
    #allocation3 [shape = 's32[1]{0}', space=sflag, size = 0x4, scoped, tag = 'scoped memory for tpu_custom_call.1']
    #allocation4 [shape = 's32[1]{0}', space=sflag, size = 0x4, scoped, tag = 'scoped memory for tpu_custom_call.1']
    #allocation5 [shape = 'u8[8192]{0}', space=vmem, size = 0x2000, scoped, tag = 'input window, operand 1, single buffered']
    #allocation6 [shape = 's32[1]{0}', space=sflag, size = 0x4, scoped, tag = 'scoped memory for tpu_custom_call.1']
    #allocation7 [shape = 'u8[8192]{0}', space=vmem, size = 0x2000, scoped, tag = 'output window, operand 0, single buffered']
    #allocation8 [shape = 'u8[8192]{0}', space=vmem, size = 0x2000, scoped, tag = 'output window, operand 1, single buffered']
    #allocation9 [shape = 's32[1]{0}', space=sflag, size = 0x4, scoped, tag = 'scoped memory for tpu_custom_call.1']
    %9 = vsyncpa [#allocation3], 0
    %10 = vsyncpa [#allocation6], 0
    %11 = vsyncpa [#allocation4], 0
    %12 = vsyncpa [#allocation9], 0
    // Predicated region
    $region2: #{tpu_custom_call.1} parent=1 // pred_check
      _
    $region3: #{tpu_custom_call.1} parent=1 // pred_check_branch
      %14 = sbr.rel (0) target = $region5
    $region4: #{tpu_custom_call.1} parent=1 // pred_region
      %s15 = sadd.s32 0, 0
      %s17 = ssub.s32 256, 256
      %18 = vsyncadd [#allocation3], %s17
      %s19 = smul.addr %s15, 128
      %s20 = scalar_lea.hbm %s0, %s19
      %s21 = sshll.u32 [#allocation2], 4
      %s22 = int_to_ptr.vmem [resolvable:$true] %s21
      %27 = dma.hbm_to_vmem [thread:$0]  %s20, 256, %s22, [#allocation3], 128, 128, 8
    $region5: #{tpu_custom_call.1} parent=1 // pred_fallthru
      _
    // Predicated region
    $region6: #{tpu_custom_call.1} parent=1 // pred_check
      _
    $region7: #{tpu_custom_call.1} parent=1 // pred_check_branch
      %29 = sbr.rel (0) target = $region9
    $region8: #{tpu_custom_call.1} parent=1 // pred_region
      %s30 = sadd.s32 0, 0
      %s32 = ssub.s32 256, 256
      %33 = vsyncadd [#allocation6], %s32
      %s34 = smul.addr %s30, 128
      %s35 = scalar_lea.hbm %s1, %s34
      %s36 = sshll.u32 [#allocation5], 4
      %s37 = int_to_ptr.vmem [resolvable:$true] %s36
      %42 = dma.hbm_to_vmem [thread:$0]  %s35, 256, %s37, [#allocation6], 128, 128, 8
    $region9: #{tpu_custom_call.1} parent=1 // pred_fallthru
      _
    // Predicated region
    $region10: #{tpu_custom_call.1} parent=1 // pred_check
      _
    $region11: #{tpu_custom_call.1} parent=1 // pred_check_branch
      %44 = sbr.rel (0) target = $region13
    $region12: #{tpu_custom_call.1} parent=1 // pred_region
      %45 = dma.done [#allocation3], 256
    $region13: #{tpu_custom_call.1} parent=1 // pred_fallthru
      _
    // Predicated region
    $region14: #{tpu_custom_call.1} parent=1 // pred_check
      _
    $region15: #{tpu_custom_call.1} parent=1 // pred_check_branch
      %47 = sbr.rel (0) target = $region17
    $region16: #{tpu_custom_call.1} parent=1 // pred_region
      %48 = dma.done [#allocation6], 256
    $region17: #{tpu_custom_call.1} parent=1 // pred_fallthru
      _
    %s49 = sadd.s32 0, 0
    %s50 = sadd.s32 0, 0
    %p51 = scmp.eq.s32.totalorder 0, 0
    // Predicated region
    $region18: #{tpu_custom_call.1} parent=1 // pred_check
      %p52 = pneg %p51
    $region19: #{tpu_custom_call.1} parent=1 // pred_check_branch
      %54 = sbr.rel (%p52) target = $region21
    $region20: #{tpu_custom_call.1} parent=1 // pred_region
      %55 = vst [vmem:[#allocation7] sm:$0xff] 0.0
      %56 = vst [vmem:[#allocation7 + $0x8] sm:$0xff] 0.0
      %57 = vst [vmem:[#allocation8] sm:$0xff] 0.0
      %58 = vst [vmem:[#allocation8 + $0x8] sm:$0xff] 0.0
    $region21: #{tpu_custom_call.1} parent=1 // pred_fallthru
      _
    %v59 = vld [vmem:[#allocation2] sm:$0xff]
    %v60 = vld [vmem:[#allocation2 + $0x8] sm:$0xff]
    %v61 = vld [vmem:[#allocation5] sm:$0xff]
    %v62 = vld [vmem:[#allocation5 + $0x8] sm:$0xff]
    %vm63 = vcmp.gt.f32.partialorder %v59, 0.0
    %vm64 = vcmp.gt.f32.partialorder %v60, 0.0
    %vm65 = vcmp.eq.f32.partialorder %v61, 1.0
    %vm66 = vcmp.eq.f32.partialorder %v62, 1.0
    %vm67 = vmand %vm63, %vm65
    %vm68 = vmand %vm64, %vm66
    %vm69 = vcmp.eq.f32.partialorder %v61, 0.0
    %vm70 = vcmp.eq.f32.partialorder %v62, 0.0
    %vm71 = vmand %vm63, %vm69
    %vm72 = vmand %vm64, %vm70
    %v73 = vsel %vm67, 1, 0
    %v74 = vsel %vm68, 1, 0
    %v75 = vcvt.s32.f32 %v73
    %v76 = vcvt.s32.f32 %v74
    %v77 = vsel %vm71, 1, 0
    %v78 = vsel %vm72, 1, 0
    %v79 = vcvt.s32.f32 %v77
    %v80 = vcvt.s32.f32 %v78
    %v81 = vld [vmem:[#allocation7] sm:$0xff]
    %v82 = vld [vmem:[#allocation7 + $0x8] sm:$0xff]
    %v83 = vadd.f32 %v81, %v75
    %v84 = vadd.f32 %v82, %v76
    %85 = vst [vmem:[#allocation7] sm:$0xff] %v83
    %86 = vst [vmem:[#allocation7 + $0x8] sm:$0xff] %v84
    %v87 = vld [vmem:[#allocation8] sm:$0xff]
    %v88 = vld [vmem:[#allocation8 + $0x8] sm:$0xff]
    %v89 = vadd.f32 %v87, %v79
    %v90 = vadd.f32 %v88, %v80
    %91 = vst [vmem:[#allocation8] sm:$0xff] %v89
    %92 = vst [vmem:[#allocation8 + $0x8] sm:$0xff] %v90
    // Predicated region
    $region22: #{tpu_custom_call.1} parent=1 // pred_check
      _
    $region23: #{tpu_custom_call.1} parent=1 // pred_check_branch
      %94 = sbr.rel (0) target = $region25
    $region24: #{tpu_custom_call.1} parent=1 // pred_region
      %s96 = ssub.s32 256, 256
      %97 = vsyncadd [#allocation4], %s96
      %s98 = sshll.u32 [#allocation7], 4
      %s99 = int_to_ptr.vmem [resolvable:$true] %s98
      %104 = dma.vmem_to_hbm [thread:$0]  %s99, 256, %s2, [#allocation4], 128, 128, 8
    $region25: #{tpu_custom_call.1} parent=1 // pred_fallthru
      _
    // Predicated region
    $region26: #{tpu_custom_call.1} parent=1 // pred_check
      _
    $region27: #{tpu_custom_call.1} parent=1 // pred_check_branch
      %106 = sbr.rel (0) target = $region29
    $region28: #{tpu_custom_call.1} parent=1 // pred_region
      %s108 = ssub.s32 256, 256
      %109 = vsyncadd [#allocation9], %s108
      %s110 = sshll.u32 [#allocation8], 4
      %s111 = int_to_ptr.vmem [resolvable:$true] %s110
      %116 = dma.vmem_to_hbm [thread:$0]  %s111, 256, %s3, [#allocation9], 128, 128, 8
    $region29: #{tpu_custom_call.1} parent=1 // pred_fallthru
      _
    // Predicated region
    $region30: #{tpu_custom_call.1} parent=1 // pred_check
      _
    $region31: #{tpu_custom_call.1} parent=1 // pred_check_branch
      %118 = sbr.rel (0) target = $region33
    $region32: #{tpu_custom_call.1} parent=1 // pred_region
      %119 = dma.done [#allocation4], 256
    $region33: #{tpu_custom_call.1} parent=1 // pred_fallthru
      _
    // Predicated region
    $region34: #{tpu_custom_call.1} parent=1 // pred_check
      _
    $region35: #{tpu_custom_call.1} parent=1 // pred_check_branch
      %121 = sbr.rel (0) target = $region37
    $region36: #{tpu_custom_call.1} parent=1 // pred_region
      %122 = dma.done [#allocation9], 256
    $region37: #{tpu_custom_call.1} parent=1 // pred_fallthru
      _
    %123 = vsyncpa [#allocation3], 1
    %124 = vsyncpa [#allocation6], 1
    %125 = vsyncpa [#allocation4], 1
    %126 = vsyncpa [#allocation9], 1

</llo_original>
